<compile_context>
chip_gen: v6e
topology: v6e:2x2x1
jax: 0.10.0
libtpu: 0.0.40
codegen_flags: <defaults>
</compile_context>

<pallas_src>
import dataclasses

import jax
import jax.numpy as jnp
from jax import lax
from jax.experimental import pallas as pl
from jax.experimental.pallas import tpu as pltpu

_LANE = 128
_SUBLANE = 8


def _round_up(x, m):
    return (x + m - 1) // m * m


def _cdiv(a, b):
    return (a + b - 1) // b


def _vmem_capacity_bytes():
    """Physical VMEM per TensorCore; conservative 64 MiB (v7x) fallback."""
    try:
        info = pltpu.get_tpu_info()
        for name in ("vmem_capacity_bytes", "vmem_bytes"):
            cap = getattr(info, name, None)
            if cap:
                return int(cap)
    except Exception:
        pass
    return 64 << 20


def _resident_spec(shape):
    """BlockSpec for grid-invariant params: single VMEM buffer, fetched once."""
    if hasattr(pl, "Buffered"):
        try:
            return pl.BlockSpec(shape, lambda i: (0, 0),
                                pipeline_mode=pl.Buffered(1))
        except TypeError:
            pass
    return pl.BlockSpec(shape, lambda i: (0, 0))


# ---------------------------------------------------------------------------
# Kernel
# ---------------------------------------------------------------------------
def _make_valuenet_kernel(num_hidden_layers):
    """Fused MLP: split-input Linear+ReLU, (L-1)x(Linear+ReLU), output Linear."""
    L = num_hidden_layers

    def kernel(x_ref, a_ref, *refs):
        # refs = (w0x, w0a, b0, [w1, b1, ...], w_out_row, b_out, out_ref)
        out_ref = refs[-1]
        params = refs[:-1]
        w0x, w0a, b0 = params[0], params[1], params[2]

        # Layer 0: fused "concat" -> two MXU pushes instead of an HBM round-trip.
        h = (jnp.dot(x_ref[...].astype(jnp.bfloat16), w0x[...],
                     preferred_element_type=jnp.float32)
             + jnp.dot(a_ref[...].astype(jnp.bfloat16), w0a[...],
                       preferred_element_type=jnp.float32)
             + b0[...])
        h = jnp.maximum(h, 0.0)  # ReLU, f32 on VPU

        # Hidden layers 1..L-1 (weights VMEM-resident, bf16 operands, f32 acc).
        for i in range(1, L):
            w = params[3 + 2 * (i - 1)]
            b = params[4 + 2 * (i - 1)]
            h = jnp.dot(h.astype(jnp.bfloat16), w[...],
                        preferred_element_type=jnp.float32) + b[...]
            h = jnp.maximum(h, 0.0)

        # Output layer: contract the (1, Hp) weight row against h's hidden dim.
        # Result is a lane-dense (1, TB) row (batch on lanes) -> unmasked stores.
        w_out = params[-2]   # (1, Hp) bf16
        b_out = params[-1]   # (1, 1)  f32
        y = lax.dot_general(
            w_out[...], h.astype(jnp.bfloat16),
            dimension_numbers=(((1,), (1,)), ((), ())),
            preferred_element_type=jnp.float32)            # (1, TB)
        out_ref[...] = (y + b_out[...]).astype(out_ref.dtype)

    return kernel


# ---------------------------------------------------------------------------
# One-time parameter preparation (hoisted out of the per-step forward)
# ---------------------------------------------------------------------------
@dataclasses.dataclass(frozen=True)
class PreparedValueNetParams:
    arrays: tuple            # kernel-layout arrays (bf16 weights, f32 biases)
    state_dim: int
    action_dim: int
    hidden_dim: int
    hp: int                  # hidden padded to 128 lanes
    num_hidden_layers: int


def prepare_valuenet_params(params, state_dim):
    """Pad / transpose / bf16-cast the flat param list into kernel layout.

    Call once per parameter update (NOT per forward call): params are runtime
    arrays, so these pads/casts are real XLA ops, not constant-folded.
    params: [W0, b0, W1, b1, ..., W_out, b_out], W as [in, out], b as [out].
    """
    num_hidden_layers = (len(params) - 2) // 2
    hidden_dim = params[0].shape[1]
    action_dim = params[0].shape[0] - state_dim
    hp = _round_up(hidden_dim, _LANE)   # zero pad: numerically exact

    def pad_w(w, rows, cols):
        return jnp.pad(
            w, ((0, rows - w.shape[0]), (0, cols - w.shape[1]))
        ).astype(jnp.bfloat16)

    def pad_b(b):
        b2 = jnp.reshape(b, (1, -1)).astype(jnp.float32)
        return jnp.pad(b2, ((0, 0), (0, hp - b2.shape[1])))

    w0 = params[0]                                   # [S+A, hidden]
    arrays = [
        pad_w(w0[:state_dim], state_dim, hp),        # w0x
        pad_w(w0[state_dim:], action_dim, hp),       # w0a
        pad_b(params[1]),                            # b0
    ]
    for i in range(1, num_hidden_layers):
        arrays.append(pad_w(params[2 * i], hp, hp))
        arrays.append(pad_b(params[2 * i + 1]))
    # Output weight as a (1, Hp) row -> last dot emits a lane-dense (1, TB) row.
    w_out_row = jnp.pad(jnp.transpose(params[-2]),
                        ((0, 0), (0, hp - hidden_dim))).astype(jnp.bfloat16)
    b_out_2d = jnp.reshape(params[-1], (1, 1)).astype(jnp.float32)
    arrays += [w_out_row, b_out_2d]
    return PreparedValueNetParams(tuple(arrays), state_dim, action_dim,
                                  hidden_dim, hp, num_hidden_layers)


# ---------------------------------------------------------------------------
# Adaptive batch tiling
# ---------------------------------------------------------------------------
def _choose_batch_tiling(batch, state_dim, action_dim, hp, in_itemsize,
                         weight_bytes, vmem_cap):
    """Returns (tile_rows, num_tiles, padded_batch, est_tile_bytes)."""
    # Per-row live VMEM estimate: double-buffered x/a blocks (padded to 128
    # lanes in VMEM), ~3 live f32 copies of the (tb, Hp) activation, bf16
    # matmul-operand copies, and the (sublane-padded) output row.
    row_x = _round_up(state_dim, _LANE) * in_itemsize * 2
    row_a = _round_up(action_dim, _LANE) * in_itemsize * 2
    row_h = 3 * hp * 4 + 2 * hp * 2
    row_out = _SUBLANE * 4 * 2
    per_row = row_x + row_a + row_h + row_out

    # Tile working-set budget: well under physical VMEM (64 MiB/TC on v7x).
    budget = max((4 << 20),
                 min(40 << 20, (vmem_cap * 3) // 5) - weight_bytes)
    tb_cap = max(_LANE, min(8192, budget // per_row) // _LANE * _LANE)

    # Small batches: a single full-array tile (never pad the batch by > ~2x).
    if _round_up(batch, 2 * _LANE) > 2 * batch:
        tb = _round_up(batch, _SUBLANE)
        return tb, 1, tb, per_row * tb

    # Large batches: even number of tiles >= 2 (both v7x TCs, no imbalance),
    # each tile as large as the VMEM budget allows (amortize per-step overhead).
    n = _round_up(max(2, _cdiv(batch, tb_cap)), 2)
    tb = _round_up(_cdiv(batch, n), _LANE)
    n = _round_up(_cdiv(batch, tb), 2)
    return tb, n, tb * n, per_row * tb


# ---------------------------------------------------------------------------
# Forward
# ---------------------------------------------------------------------------
def value_net_forward(x, a, params, *, interpret=False):
    """ValueNet forward: relu(Linear([x, a]))... -> Linear(hidden, 1).

    `params` is either the flat [W0, b0, ..., W_out, b_out] list or a
    PreparedValueNetParams (preferred: prepare once, reuse every step).
    Returns (batch, 1) float32, matching the PyTorch module.
    """
    batch, state_dim = x.shape
    action_dim = a.shape[1]

    if isinstance(params, PreparedValueNetParams):
        prep = params
    else:
        prep = prepare_valuenet_params(params, state_dim)
    if prep.state_dim != state_dim or prep.action_dim != action_dim:
        raise ValueError("prepared params do not match input dims")

    kernel_params = prep.arrays
    hp = prep.hp
    L = prep.num_hidden_layers
    weight_bytes = sum(int(p.size) * p.dtype.itemsize for p in kernel_params)

    vmem_cap = _vmem_capacity_bytes()
    tb, num_tiles, batch_p, est_tile_bytes = _choose_batch_tiling(
        batch, state_dim, action_dim, hp, x.dtype.itemsize,
        weight_bytes, vmem_cap)

    if batch_p != batch:
        x = jnp.pad(x, ((0, batch_p - batch), (0, 0)))
        a = jnp.pad(a, ((0, batch_p - batch), (0, 0)))

    # ---- specs ----
    x_spec = pl.BlockSpec((tb, state_dim), lambda i: (i, 0))
    a_spec = pl.BlockSpec((tb, action_dim), lambda i: (i, 0))
    param_specs = [_resident_spec(p.shape) for p in kernel_params]
    out_spec = pl.BlockSpec((1, tb), lambda i: (0, i))   # lane-dense output row

    # Explicit VMEM limit: above v5e's 16 MiB scoped default, below physical
    # (64 MiB/TC on v7x), with headroom over the estimated working set.
    vmem_limit = int(min(vmem_cap - (8 << 20),
                         max(32 << 20,
                             est_tile_bytes + weight_bytes + (8 << 20))))

    flops = 2 * batch_p * ((state_dim + action_dim) * hp
                           + (L - 1) * hp * hp + hp)
    bytes_accessed = (x.size * x.dtype.itemsize + a.size * a.dtype.itemsize
                      + batch_p * 4 + weight_bytes)

    out = pl.pallas_call(
        _make_valuenet_kernel(L),
        out_shape=jax.ShapeDtypeStruct((1, batch_p), jnp.float32),
        grid=(num_tiles,),
        in_specs=[x_spec, a_spec] + param_specs,
        out_specs=out_spec,
        compiler_params=pltpu.CompilerParams(
            dimension_semantics=("parallel",),
            vmem_limit_bytes=vmem_limit),
        cost_estimate=pl.CostEstimate(
            flops=flops, transcendentals=0, bytes_accessed=bytes_accessed),
        interpret=interpret,
    )(x, a, *kernel_params)

    # (1, batch_p) -> (batch, 1): contiguous reshape + slice (layout plumbing).
    return jnp.reshape(out, (batch_p, 1))[:batch]


# ---------------------------------------------------------------------------
# Init + references (mirror the PyTorch module)
# ---------------------------------------------------------------------------
def init_valuenet_params(key, state_dim, hidden_dim, num_hidden_layers, action_dim):
    """Mirror layer_init: orthogonal weights (std=sqrt(2); output std=1), zero bias.

    Weights returned as [in, out] (transposed vs PyTorch), biases as [out].
    """
    params = []
    in_dim = state_dim + action_dim
    dims = [in_dim] + [hidden_dim] * num_hidden_layers
    orth_hidden = jax.nn.initializers.orthogonal(scale=2.0 ** 0.5)
    orth_out = jax.nn.initializers.orthogonal(scale=1.0)
    keys = jax.random.split(key, num_hidden_layers + 1)
    for i in range(num_hidden_layers):
        w_t = orth_hidden(keys[i], (dims[i + 1], dims[i]), jnp.float32)  # torch [out,in]
        params.append(jnp.transpose(w_t))                                # [in, out]
        params.append(jnp.zeros((dims[i + 1],), jnp.float32))
    w_out_t = orth_out(keys[-1], (1, hidden_dim), jnp.float32)
    params.append(jnp.transpose(w_out_t))                                # [hidden, 1]
    params.append(jnp.zeros((1,), jnp.float32))
    return params


def _reference_forward_f32(x, a, params):
    """Pure-f32 reference of the PyTorch module semantics."""
    h = jnp.concatenate([x, a], axis=1)
    L = (len(params) - 2) // 2
    for i in range(L):
        h = jnp.maximum(h @ params[2 * i] + params[2 * i + 1], 0.0)
    return h @ params[-2] + params[-1]


def _reference_forward_bf16(x, a, params):
    """Reference mirroring the kernel's bf16-operand / f32-accumulate path."""
    def bdot(lhs, w):
        return jnp.dot(lhs.astype(jnp.bfloat16), w.astype(jnp.bfloat16),
                       preferred_element_type=jnp.float32)
    h = jnp.concatenate([x, a], axis=1)
    L = (len(params) - 2) // 2
    for i in range(L):
        h = jnp.maximum(bdot(h, params[2 * i]) + params[2 * i + 1], 0.0)
    return bdot(h, params[-2]) + params[-1]


if __name__ == "__main__":
    # Small shapes consistent with the module's forward.
    batch = 8
    state_dim = 16
    action_dim = 8
    hidden_dim = 32
    num_hidden_layers = 2

    key = jax.random.PRNGKey(0)
    kx, ka, kp = jax.random.split(key, 3)
    x = jax.random.normal(kx, (batch, state_dim), jnp.float32)
    a = jax.random.normal(ka, (batch, action_dim), jnp.float32)
    params = init_valuenet_params(kp, state_dim, hidden_dim,
                                  num_hidden_layers, action_dim)

    # One-time weight preparation, reused across all forward calls.
    prepared = prepare_valuenet_params(params, state_dim)

    out = jax.block_until_ready(value_net_forward(x, a, prepared))
    assert out.shape == (batch, 1), out.shape
    ref_bf16 = _reference_forward_bf16(x, a, params)
    ref_f32 = _reference_forward_f32(x, a, params)
    assert jnp.allclose(out, ref_bf16, atol=1e-3, rtol=1e-3), (out, ref_bf16)
    assert jnp.allclose(out, ref_f32, atol=5e-2, rtol=5e-2), (out, ref_f32)

    # Raw-params path (prepares internally) must match the prepared path.
    out_raw = jax.block_until_ready(value_net_forward(x, a, params))
    assert jnp.allclose(out, out_raw, atol=0.0, rtol=0.0)

    # Multi-tile path: even grid (>= 2 tiles) so both v7x TCs are used.
    big_batch = 1536
    kx2, ka2 = jax.random.split(jax.random.PRNGKey(1))
    x2 = jax.random.normal(kx2, (big_batch, state_dim), jnp.float32)
    a2 = jax.random.normal(ka2, (big_batch, action_dim), jnp.float32)
    out2 = jax.block_until_ready(value_net_forward(x2, a2, prepared))
    assert out2.shape == (big_batch, 1), out2.shape
    ref2 = _reference_forward_bf16(x2, a2, params)
    assert jnp.allclose(out2, ref2, atol=1e-3, rtol=1e-3)

    print("KERNEL_OK")
</pallas_src>

<mosaic_0001>
module attributes {stable_mosaic.version = 11 : i64} {
  func.func @kernel(%arg0: i32, %arg1: memref<8x16xf32, #tpu.memory_space<vmem>>, %arg2: memref<8x8xf32, #tpu.memory_space<vmem>>, %arg3: memref<16x128xbf16, #tpu.memory_space<vmem>>, %arg4: memref<8x128xbf16, #tpu.memory_space<vmem>>, %arg5: memref<1x128xf32, #tpu.memory_space<vmem>>, %arg6: memref<128x128xbf16, #tpu.memory_space<vmem>>, %arg7: memref<1x128xf32, #tpu.memory_space<vmem>>, %arg8: memref<1x128xbf16, #tpu.memory_space<vmem>>, %arg9: memref<1x1xf32, #tpu.memory_space<vmem>>, %arg10: memref<1x8xf32, #tpu.memory_space<vmem>>) attributes {dimension_semantics = [#tpu.dimension_semantics<parallel>], iteration_bounds = array<i64: 1>, scalar_prefetch = 0 : i64, scratch_operands = 0 : i64, tpu.core_type = #tpu.core_type<tc>, window_params = [{transform_indices = @transform_0, window_bounds = array<i64: 8, 16>}, {transform_indices = @transform_1, window_bounds = array<i64: 8, 8>}, {pipeline_mode = #tpu.pipeline_mode<synchronous>, transform_indices = @transform_2, window_bounds = array<i64: 16, 128>}, {pipeline_mode = #tpu.pipeline_mode<synchronous>, transform_indices = @transform_3, window_bounds = array<i64: 8, 128>}, {pipeline_mode = #tpu.pipeline_mode<synchronous>, transform_indices = @transform_4, window_bounds = array<i64: 1, 128>}, {pipeline_mode = #tpu.pipeline_mode<synchronous>, transform_indices = @transform_5, window_bounds = array<i64: 128, 128>}, {pipeline_mode = #tpu.pipeline_mode<synchronous>, transform_indices = @transform_6, window_bounds = array<i64: 1, 128>}, {pipeline_mode = #tpu.pipeline_mode<synchronous>, transform_indices = @transform_7, window_bounds = array<i64: 1, 128>}, {pipeline_mode = #tpu.pipeline_mode<synchronous>, transform_indices = @transform_8, window_bounds = array<i64: 1, 1>}, {transform_indices = @transform_9, window_bounds = array<i64: 1, 8>}]} {
    %c0 = arith.constant 0 : index
    %c0_0 = arith.constant 0 : index
    %0 = vector.load %arg1[%c0, %c0_0] : memref<8x16xf32, #tpu.memory_space<vmem>>, vector<8x16xf32>
    %1 = arith.truncf %0 : vector<8x16xf32> to vector<8x16xbf16>
    %c0_1 = arith.constant 0 : index
    %c0_2 = arith.constant 0 : index
    %2 = vector.load %arg3[%c0_1, %c0_2] : memref<16x128xbf16, #tpu.memory_space<vmem>>, vector<16x128xbf16>
    %cst = arith.constant dense<0.000000e+00> : vector<8x128xf32>
    %3 = tpu.matmul %1, %2, %cst {dimension_numbers = #tpu.dot_dimension_numbers<[1], [0], [0], [1], [0, 0, 1, 1], [], []>} : vector<8x16xbf16>, vector<16x128xbf16>, vector<8x128xf32> -> vector<8x128xf32>
    %c0_3 = arith.constant 0 : index
    %c0_4 = arith.constant 0 : index
    %4 = vector.load %arg2[%c0_3, %c0_4] : memref<8x8xf32, #tpu.memory_space<vmem>>, vector<8x8xf32>
    %5 = arith.truncf %4 : vector<8x8xf32> to vector<8x8xbf16>
    %c0_5 = arith.constant 0 : index
    %c0_6 = arith.constant 0 : index
    %6 = vector.load %arg4[%c0_5, %c0_6] : memref<8x128xbf16, #tpu.memory_space<vmem>>, vector<8x128xbf16>
    %cst_7 = arith.constant dense<0.000000e+00> : vector<8x128xf32>
    %7 = tpu.matmul %5, %6, %cst_7 {dimension_numbers = #tpu.dot_dimension_numbers<[1], [0], [0], [1], [0, 0, 1, 1], [], []>} : vector<8x8xbf16>, vector<8x128xbf16>, vector<8x128xf32> -> vector<8x128xf32>
    %8 = arith.addf %3, %7 : vector<8x128xf32>
    %c0_8 = arith.constant 0 : index
    %c0_9 = arith.constant 0 : index
    %9 = vector.load %arg5[%c0_8, %c0_9] : memref<1x128xf32, #tpu.memory_space<vmem>>, vector<1x128xf32>
    %10 = vector.broadcast %9 : vector<1x128xf32> to vector<8x128xf32>
    %11 = arith.addf %8, %10 : vector<8x128xf32>
    %cst_10 = arith.constant 0.000000e+00 : f32
    %12 = vector.broadcast %cst_10 : f32 to vector<8x128xf32>
    %13 = arith.maximumf %11, %12 : vector<8x128xf32>
    %14 = arith.truncf %13 : vector<8x128xf32> to vector<8x128xbf16>
    %c0_11 = arith.constant 0 : index
    %c0_12 = arith.constant 0 : index
    %15 = vector.load %arg6[%c0_11, %c0_12] : memref<128x128xbf16, #tpu.memory_space<vmem>>, vector<128x128xbf16>
    %cst_13 = arith.constant dense<0.000000e+00> : vector<8x128xf32>
    %16 = tpu.matmul %14, %15, %cst_13 {dimension_numbers = #tpu.dot_dimension_numbers<[1], [0], [0], [1], [0, 0, 1, 1], [], []>} : vector<8x128xbf16>, vector<128x128xbf16>, vector<8x128xf32> -> vector<8x128xf32>
    %c0_14 = arith.constant 0 : index
    %c0_15 = arith.constant 0 : index
    %17 = vector.load %arg7[%c0_14, %c0_15] : memref<1x128xf32, #tpu.memory_space<vmem>>, vector<1x128xf32>
    %18 = vector.broadcast %17 : vector<1x128xf32> to vector<8x128xf32>
    %19 = arith.addf %16, %18 : vector<8x128xf32>
    %cst_16 = arith.constant 0.000000e+00 : f32
    %20 = vector.broadcast %cst_16 : f32 to vector<8x128xf32>
    %21 = arith.maximumf %19, %20 : vector<8x128xf32>
    %c0_17 = arith.constant 0 : index
    %c0_18 = arith.constant 0 : index
    %22 = vector.load %arg8[%c0_17, %c0_18] : memref<1x128xbf16, #tpu.memory_space<vmem>>, vector<1x128xbf16>
    %23 = arith.truncf %21 : vector<8x128xf32> to vector<8x128xbf16>
    %cst_19 = arith.constant dense<0.000000e+00> : vector<1x8xf32>
    %24 = tpu.matmul %22, %23, %cst_19 {dimension_numbers = #tpu.dot_dimension_numbers<[1], [1], [0], [0], [0, 0, 1, 0], [], []>} : vector<1x128xbf16>, vector<8x128xbf16>, vector<1x8xf32> -> vector<1x8xf32>
    %c0_20 = arith.constant 0 : index
    %c0_21 = arith.constant 0 : index
    %25 = vector.load %arg9[%c0_20, %c0_21] : memref<1x1xf32, #tpu.memory_space<vmem>>, vector<1x1xf32>
    %26 = vector.broadcast %25 : vector<1x1xf32> to vector<1x8xf32>
    %27 = arith.addf %24, %26 : vector<1x8xf32>
    %c0_22 = arith.constant 0 : index
    %c0_23 = arith.constant 0 : index
    %28 = vector.load %arg10[%c0_22, %c0_23] : memref<1x8xf32, #tpu.memory_space<vmem>>, vector<1x8xf32>
    tpu.vector_store %arg10[%c0_22, %c0_23], %27 {strides = array<i32>} : memref<1x8xf32, #tpu.memory_space<vmem>>, vector<1x8xf32>,
    return
  }
  func.func @transform_0(%arg0: i32) -> (i32, i32) {
    %c0_i32 = arith.constant 0 : i32
    %c0_i32_0 = arith.constant 0 : i32
    return %arg0, %c0_i32 : i32, i32
  }
  func.func @transform_1(%arg0: i32) -> (i32, i32) {
    %c0_i32 = arith.constant 0 : i32
    %c0_i32_0 = arith.constant 0 : i32
    return %arg0, %c0_i32 : i32, i32
  }
  func.func @transform_2(%arg0: i32) -> (i32, i32) {
    %c0_i32 = arith.constant 0 : i32
    %c0_i32_0 = arith.constant 0 : i32
    %c0_i32_1 = arith.constant 0 : i32
    return %c0_i32, %c0_i32_0 : i32, i32
  }
  func.func @transform_3(%arg0: i32) -> (i32, i32) {
    %c0_i32 = arith.constant 0 : i32
    %c0_i32_0 = arith.constant 0 : i32
    %c0_i32_1 = arith.constant 0 : i32
    return %c0_i32, %c0_i32_0 : i32, i32
  }
  func.func @transform_4(%arg0: i32) -> (i32, i32) {
    %c0_i32 = arith.constant 0 : i32
    %c0_i32_0 = arith.constant 0 : i32
    %c0_i32_1 = arith.constant 0 : i32
    return %c0_i32, %c0_i32_0 : i32, i32
  }
  func.func @transform_5(%arg0: i32) -> (i32, i32) {
    %c0_i32 = arith.constant 0 : i32
    %c0_i32_0 = arith.constant 0 : i32
    %c0_i32_1 = arith.constant 0 : i32
    return %c0_i32, %c0_i32_0 : i32, i32
  }
  func.func @transform_6(%arg0: i32) -> (i32, i32) {
    %c0_i32 = arith.constant 0 : i32
    %c0_i32_0 = arith.constant 0 : i32
    %c0_i32_1 = arith.constant 0 : i32
    return %c0_i32, %c0_i32_0 : i32, i32
  }
  func.func @transform_7(%arg0: i32) -> (i32, i32) {
    %c0_i32 = arith.constant 0 : i32
    %c0_i32_0 = arith.constant 0 : i32
    %c0_i32_1 = arith.constant 0 : i32
    return %c0_i32, %c0_i32_0 : i32, i32
  }
  func.func @transform_8(%arg0: i32) -> (i32, i32) {
    %c0_i32 = arith.constant 0 : i32
    %c0_i32_0 = arith.constant 0 : i32
    %c0_i32_1 = arith.constant 0 : i32
    return %c0_i32, %c0_i32_0 : i32, i32
  }
  func.func @transform_9(%arg0: i32) -> (i32, i32) {
    %c0_i32 = arith.constant 0 : i32
    %c0_i32_0 = arith.constant 0 : i32
    return %c0_i32, %arg0 : i32, i32
  }
}

</mosaic_0001>

<llo_original>
// kernel: tpu_custom_call.1
$region0: #{tpu_custom_call.1}
  #allocation0 [shape = 'u32[]', space=smem, size = 0x4, offset = 0x4, fixed_abs, tag = 'smem constant byte address 0x4 - core index']
  #allocation1 [shape = 'u32[144,128]{1,0:T(1,128)}', space=vmem, size = 0x12000, scoped, tag = 'internal scratch']
  #allocation2 [shape = 'f32[1,1]{1,0:T(1,128)S(1)}', space=vmem, size = 0x200, scoped, tag = 'scoped memory for tpu_custom_call.1']
  %s0 = inlined_call_operand.hbm [shape: f32[8,16], index: 0, kind: input, shape index: {}]
  %s1 = inlined_call_operand.hbm [shape: f32[8,8], index: 1, kind: input, shape index: {}]
  %s2 = inlined_call_operand.hbm [shape: bf16[16,128], index: 2, kind: input, shape index: {}]
  %s3 = inlined_call_operand.vmem [shape: bf16[8,128], index: 3, kind: input, shape index: {}]
  %s4 = inlined_call_operand.vmem [shape: f32[1,128], index: 4, kind: input, shape index: {}]
  %s5 = inlined_call_operand.hbm [shape: bf16[128,128], index: 5, kind: input, shape index: {}]
  %s6 = inlined_call_operand.vmem [shape: f32[1,128], index: 6, kind: input, shape index: {}]
  %s7 = inlined_call_operand.vmem [shape: bf16[1,128], index: 7, kind: input, shape index: {}]
  %s8 = inlined_call_operand.<no memory space> [shape: f32[1,1], index: 8, kind: input, shape index: {}]
  %s9 = inlined_call_operand.hbm [shape: f32[1,8], index: 9, kind: output, shape index: {}]
  %s10 = sld [smem:[#allocation0]]
  $region62: #{tpu_custom_call.1} parent=0
    _
  %s12 = ssub.s32 1, %s10
  %s13 = scalar_select 0, %s12, %s10
  %v14 = vstv %s8
  %15 = vst [vmem:[#allocation2] sm:$0x1] %v14
  $region1: #{tpu_custom_call.1} parent=0
    #allocation3 [shape = 'u8[4096]{0}', space=vmem, size = 0x1000, scoped, tag = 'input window, operand 0, single buffered']
    #allocation4 [shape = 's32[1]{0}', space=sflag, size = 0x4, scoped, tag = 'scoped memory for tpu_custom_call.1']
    #allocation5 [shape = 's32[1]{0}', space=sflag, size = 0x4, scoped, tag = 'scoped memory for tpu_custom_call.1']
    #allocation6 [shape = 'u8[4096]{0}', space=vmem, size = 0x1000, scoped, tag = 'input window, operand 1, single buffered']
    #allocation7 [shape = 's32[1]{0}', space=sflag, size = 0x4, scoped, tag = 'scoped memory for tpu_custom_call.1']
    #allocation8 [shape = 'u8[4096]{0}', space=vmem, size = 0x1000, scoped, tag = 'input window, operand 2, single buffered']
    #allocation9 [shape = 'u8[32768]{0}', space=vmem, size = 0x8000, scoped, tag = 'input window, operand 5, single buffered']
    #allocation10 [shape = 's32[1]{0}', space=sflag, size = 0x4, scoped, tag = 'scoped memory for tpu_custom_call.1']
    #allocation11 [shape = 'u8[512]{0}', space=vmem, size = 0x400, scoped, tag = 'output window, operand 0, single buffered']
    %16 = vsyncpa [#allocation4], 0
    %17 = vsyncpa [#allocation7], 0
    %18 = vsyncpa [#allocation10], 0
    %19 = vsyncpa [#allocation5], 0
    // Predicated region
    $region2: #{tpu_custom_call.1} parent=1 // pred_check
      _
    $region3: #{tpu_custom_call.1} parent=1 // pred_check_branch
      %21 = sbr.rel (0) target = $region5
    $region4: #{tpu_custom_call.1} parent=1 // pred_region
      %s23 = ssub.s32 128, 128
      %24 = vsyncadd [#allocation4], %s23
      %s26 = sshll.u32 [#allocation3], 4
      %s27 = int_to_ptr.vmem [resolvable:$true] %s26
      %29 = dma.hbm_to_vmem [thread:$0]  %s0, 128, %s27, [#allocation4]
    $region5: #{tpu_custom_call.1} parent=1 // pred_fallthru
      _
    // Predicated region
    $region6: #{tpu_custom_call.1} parent=1 // pred_check
      _
    $region7: #{tpu_custom_call.1} parent=1 // pred_check_branch
      %31 = sbr.rel (0) target = $region9
    $region8: #{tpu_custom_call.1} parent=1 // pred_region
      %s33 = ssub.s32 128, 128
      %34 = vsyncadd [#allocation7], %s33
      %s36 = sshll.u32 [#allocation6], 4
      %s37 = int_to_ptr.vmem [resolvable:$true] %s36
      %39 = dma.hbm_to_vmem [thread:$0]  %s1, 128, %s37, [#allocation7]
    $region9: #{tpu_custom_call.1} parent=1 // pred_fallthru
      _
    // Predicated region
    $region10: #{tpu_custom_call.1} parent=1 // pred_check
      _
    $region11: #{tpu_custom_call.1} parent=1 // pred_check_branch
      %41 = sbr.rel (0) target = $region13
    $region12: #{tpu_custom_call.1} parent=1 // pred_region
      %s43 = ssub.s32 128, 128
      %44 = vsyncadd [#allocation7], %s43
      %s45 = sshll.u32 [#allocation8], 4
      %s46 = int_to_ptr.vmem [resolvable:$true] %s45
      %51 = dma.hbm_to_vmem [thread:$0]  %s2, 128, %s46, [#allocation7], 64, 64, 4
    $region13: #{tpu_custom_call.1} parent=1 // pred_fallthru
      _
    // Predicated region
    $region14: #{tpu_custom_call.1} parent=1 // pred_check
      _
    $region15: #{tpu_custom_call.1} parent=1 // pred_check_branch
      %53 = sbr.rel (0) target = $region17
    $region16: #{tpu_custom_call.1} parent=1 // pred_region
      _
    $region17: #{tpu_custom_call.1} parent=1 // pred_fallthru
      _
    // Predicated region
    $region18: #{tpu_custom_call.1} parent=1 // pred_check
      _
    $region19: #{tpu_custom_call.1} parent=1 // pred_check_branch
      %55 = sbr.rel (0) target = $region21
    $region20: #{tpu_custom_call.1} parent=1 // pred_region
      _
    $region21: #{tpu_custom_call.1} parent=1 // pred_fallthru
      _
    // Predicated region
    $region22: #{tpu_custom_call.1} parent=1 // pred_check
      _
    $region23: #{tpu_custom_call.1} parent=1 // pred_check_branch
      %57 = sbr.rel (0) target = $region25
    $region24: #{tpu_custom_call.1} parent=1 // pred_region
      %s59 = ssub.s32 1024, 1024
      %60 = vsyncadd [#allocation10], %s59
      %s61 = sshll.u32 [#allocation9], 4
      %s62 = int_to_ptr.vmem [resolvable:$true] %s61
      %67 = dma.hbm_to_vmem [thread:$0]  %s5, 1024, %s62, [#allocation10], 64, 64, 4
    $region25: #{tpu_custom_call.1} parent=1 // pred_fallthru
      _
    // Predicated region
    $region26: #{tpu_custom_call.1} parent=1 // pred_check
      _
    $region27: #{tpu_custom_call.1} parent=1 // pred_check_branch
      %69 = sbr.rel (0) target = $region29
    $region28: #{tpu_custom_call.1} parent=1 // pred_region
      _
    $region29: #{tpu_custom_call.1} parent=1 // pred_fallthru
      _
    // Predicated region
    $region30: #{tpu_custom_call.1} parent=1 // pred_check
      _
    $region31: #{tpu_custom_call.1} parent=1 // pred_check_branch
      %71 = sbr.rel (0) target = $region33
    $region32: #{tpu_custom_call.1} parent=1 // pred_region
      _
    $region33: #{tpu_custom_call.1} parent=1 // pred_fallthru
      _
    // Predicated region
    $region34: #{tpu_custom_call.1} parent=1 // pred_check
      _
    $region35: #{tpu_custom_call.1} parent=1 // pred_check_branch
      %73 = sbr.rel (0) target = $region37
    $region36: #{tpu_custom_call.1} parent=1 // pred_region
      _
    $region37: #{tpu_custom_call.1} parent=1 // pred_fallthru
      _
    // Predicated region
    $region38: #{tpu_custom_call.1} parent=1 // pred_check
      _
    $region39: #{tpu_custom_call.1} parent=1 // pred_check_branch
      %75 = sbr.rel (0) target = $region41
    $region40: #{tpu_custom_call.1} parent=1 // pred_region
      %76 = dma.done [#allocation4], 128
    $region41: #{tpu_custom_call.1} parent=1 // pred_fallthru
      _
    // Predicated region
    $region42: #{tpu_custom_call.1} parent=1 // pred_check
      _
    $region43: #{tpu_custom_call.1} parent=1 // pred_check_branch
      %78 = sbr.rel (0) target = $region45
    $region44: #{tpu_custom_call.1} parent=1 // pred_region
      %79 = dma.done [#allocation7], 128
    $region45: #{tpu_custom_call.1} parent=1 // pred_fallthru
      _
    // Predicated region
    $region46: #{tpu_custom_call.1} parent=1 // pred_check
      _
    $region47: #{tpu_custom_call.1} parent=1 // pred_check_branch
      %81 = sbr.rel (0) target = $region49
    $region48: #{tpu_custom_call.1} parent=1 // pred_region
      %82 = dma.done [#allocation7], 128
    $region49: #{tpu_custom_call.1} parent=1 // pred_fallthru
      _
    // Predicated region
    $region50: #{tpu_custom_call.1} parent=1 // pred_check
      _
    $region51: #{tpu_custom_call.1} parent=1 // pred_check_branch
      %84 = sbr.rel (0) target = $region53
    $region52: #{tpu_custom_call.1} parent=1 // pred_region
      %85 = dma.done [#allocation10], 1024
    $region53: #{tpu_custom_call.1} parent=1 // pred_fallthru
      _
    %v87 = vld [vmem:[#allocation3] sm:$0xff]
    %v88 = vpack.c.bf16 %v87, %v87
    %v89 = vld [vmem:[#allocation8] sm:$0xf]
    %v90 = vld [vmem:[#allocation8 + $0x4] sm:$0xf]
    %v91 = vld [vmem:[#allocation6] sm:$0xff]
    %v92 = vpack.c.bf16 %v91, %v91
    %v93 = vld [vmem:[%s3] sm:$0xf]
    %vm94 = vcmask 64512
    %v96 = vsel %vm94, %v92, 0
    %vm98 = vcmask 1043456
    %v100 = vsel %vm98, %v93, 0
    %102 = vmatprep.subr.bf16.mxu0 0
    %103 = vmatpush1.bf16.msra.mxu0 0
    %104 = vmatprep.subr.bf16.mxu0 0
    %105 = vmatpush1.bf16.msra.mxu0 0
    %106 = vmatprep.subr.bf16.mxu0 0
    %107 = vmatpush1.bf16.msra.mxu0 0
    %108 = vmatprep.subr.bf16.mxu0 0
    %109 = vmatpush1.bf16.msra.mxu0 0
    %110 = vmatprep.subr.bf16.mxu0 0
    %111 = vmatpush1.bf16.msra.mxu0 0
    %112 = vmatprep.subr.bf16.mxu0 0
    %113 = vmatpush1.bf16.msra.mxu0 0
    %114 = vmatprep.subr.bf16.mxu0 0
    %115 = vmatpush1.bf16.msra.mxu0 0
    %116 = vmatprep.subr.bf16.mxu0 0
    %117 = vmatpush1.bf16.msra.mxu0 %v100
    %118 = vmatprep.subr.bf16.mxu0 0
    %119 = vmatpush2.bf16.msra.mxu0 0
    %120 = vmatprep.subr.bf16.mxu0 0
    %121 = vmatpush2.bf16.msra.mxu0 0
    %122 = vmatprep.subr.bf16.mxu0 0
    %123 = vmatpush2.bf16.msra.mxu0 0
    %124 = vmatprep.subr.bf16.mxu0 0
    %125 = vmatpush2.bf16.msra.mxu0 0
    %126 = vmatprep.subr.bf16.mxu0 0
    %127 = vmatpush2.bf16.msra.mxu0 0
    %128 = vmatprep.subr.bf16.mxu0 0
    %129 = vmatpush2.bf16.msra.mxu0 0
    %130 = vmatprep.subr.bf16.mxu0 0
    %131 = vmatpush2.bf16.msra.mxu0 0
    %132 = vmatprep.subr.bf16.mxu0 0
    %133 = vmatpush2.bf16.msra.mxu0 0
    %134 = vmatprep.mubr.bf16.mxu0 0
    %135 = vmatmul.mubr.bf16.gmra.mxu0 %v96
    %v136 = vpop.f32.mrf.mxu0
    %v137 = vadd.f32 0.0, %v136
    %v138 = vpop.f32.mrf.mxu0
    %v139 = vpop.f32.mrf.mxu0
    %v140 = vpop.f32.mrf.mxu0
    %141 = vdwg.mxu0
    %v144 = vunpack.c.l.b16 %v89
    %v145 = vunpack.c.l.b16 %v90
    %v146 = vpack.c.b16 %v145, %v144
    %vm148 = vcmask 130048
    %v150 = vsel %vm148, %v88, 0
    %152 = vmatprep.subr.bf16.mxu0 0
    %153 = vmatpush1.bf16.msra.mxu0 0
    %154 = vmatprep.subr.bf16.mxu0 0
    %155 = vmatpush1.bf16.msra.mxu0 0
    %156 = vmatprep.subr.bf16.mxu0 0
    %157 = vmatpush1.bf16.msra.mxu0 0
    %158 = vmatprep.subr.bf16.mxu0 0
    %159 = vmatpush1.bf16.msra.mxu0 0
    %160 = vmatprep.subr.bf16.mxu0 0
    %161 = vmatpush1.bf16.msra.mxu0 0
    %162 = vmatprep.subr.bf16.mxu0 0
    %163 = vmatpush1.bf16.msra.mxu0 0
    %164 = vmatprep.subr.bf16.mxu0 0
    %165 = vmatpush1.bf16.msra.mxu0 0
    %166 = vmatprep.subr.bf16.mxu0 0
    %167 = vmatpush1.bf16.msra.mxu0 %v146
    %168 = vmatprep.subr.bf16.mxu0 0
    %169 = vmatpush2.bf16.msra.mxu0 0
    %170 = vmatprep.subr.bf16.mxu0 0
    %171 = vmatpush2.bf16.msra.mxu0 0
    %172 = vmatprep.subr.bf16.mxu0 0
    %173 = vmatpush2.bf16.msra.mxu0 0
    %174 = vmatprep.subr.bf16.mxu0 0
    %175 = vmatpush2.bf16.msra.mxu0 0
    %176 = vmatprep.subr.bf16.mxu0 0
    %177 = vmatpush2.bf16.msra.mxu0 0
    %178 = vmatprep.subr.bf16.mxu0 0
    %179 = vmatpush2.bf16.msra.mxu0 0
    %180 = vmatprep.subr.bf16.mxu0 0
    %181 = vmatpush2.bf16.msra.mxu0 0
    %182 = vmatprep.subr.bf16.mxu0 0
    %183 = vmatpush2.bf16.msra.mxu0 0
    %184 = vmatprep.mubr.bf16.mxu0 0
    %185 = vmatmul.mubr.bf16.gmra.mxu0 %v150
    %v186 = vpop.f32.mrf.mxu0
    %v187 = vadd.f32 %v137, %v186
    %v188 = vpop.f32.mrf.mxu0
    %v189 = vpop.f32.mrf.mxu0
    %v190 = vpop.f32.mrf.mxu0
    %191 = vdwg.mxu0
    %v192 = vld [vmem:[%s4] sm:$0x1]
    %v194 = vlaneseq
    %v195 = vshrl.u32 %v194, 7
    %v196 = vsub.s32 0, %v195
    %v197 = vrot.slane %v192, %v196
    %v199 = vadd.f32 %v187, %v197
    %v200 = vmax.f32 %v199, 0.0
    %v201 = vpack.c.bf16 %v200, %v200
    %v202 = vld [vmem:[#allocation9] sm:$0xf]
    %v203 = vld [vmem:[#allocation9 + $0x4] sm:$0xf]
    %v204 = vld [vmem:[#allocation9 + $0x8] sm:$0xf]
    %v205 = vld [vmem:[#allocation9 + $0xc] sm:$0xf]
    %v206 = vld [vmem:[#allocation9 + $0x10] sm:$0xf]
    %v207 = vld [vmem:[#allocation9 + $0x14] sm:$0xf]
    %v208 = vld [vmem:[#allocation9 + $0x18] sm:$0xf]
    %v209 = vld [vmem:[#allocation9 + $0x1c] sm:$0xf]
    %v210 = vld [vmem:[#allocation9 + $0x20] sm:$0xf]
    %v211 = vld [vmem:[#allocation9 + $0x24] sm:$0xf]
    %v212 = vld [vmem:[#allocation9 + $0x28] sm:$0xf]
    %v213 = vld [vmem:[#allocation9 + $0x2c] sm:$0xf]
    %v214 = vld [vmem:[#allocation9 + $0x30] sm:$0xf]
    %v215 = vld [vmem:[#allocation9 + $0x34] sm:$0xf]
    %v216 = vld [vmem:[#allocation9 + $0x38] sm:$0xf]
    %v217 = vld [vmem:[#allocation9 + $0x3c] sm:$0xf]
    %v218 = vld [vmem:[%s6] sm:$0x1]
    %v220 = vlaneseq
    %v221 = vshrl.u32 %v220, 7
    %v222 = vsub.s32 0, %v221
    %v223 = vrot.slane %v218, %v222
    %v241 = vunpack.c.l.b16 %v202
    %v242 = vunpack.c.l.b16 %v203
    %v243 = vunpack.c.l.b16 %v204
    %v244 = vunpack.c.l.b16 %v205
    %v245 = vunpack.c.l.b16 %v206
    %v246 = vunpack.c.l.b16 %v207
    %v247 = vunpack.c.l.b16 %v208
    %v248 = vunpack.c.l.b16 %v209
    %v249 = vunpack.c.l.b16 %v210
    %v250 = vunpack.c.l.b16 %v211
    %v251 = vunpack.c.l.b16 %v212
    %v252 = vunpack.c.l.b16 %v213
    %v253 = vunpack.c.l.b16 %v214
    %v254 = vunpack.c.l.b16 %v215
    %v255 = vunpack.c.l.b16 %v216
    %v256 = vunpack.c.l.b16 %v217
    %v257 = vpack.c.b16 %v242, %v241
    %v258 = vpack.c.b16 %v244, %v243
    %v259 = vpack.c.b16 %v246, %v245
    %v260 = vpack.c.b16 %v248, %v247
    %v261 = vpack.c.b16 %v250, %v249
    %v262 = vpack.c.b16 %v252, %v251
    %v263 = vpack.c.b16 %v254, %v253
    %v264 = vpack.c.b16 %v256, %v255
    %273 = vmatprep.subr.bf16.mxu0 0
    %274 = vmatpush1.bf16.msra.mxu0 %v264
    %275 = vmatprep.subr.bf16.mxu0 0
    %276 = vmatpush1.bf16.msra.mxu0 %v263
    %277 = vmatprep.subr.bf16.mxu0 0
    %278 = vmatpush1.bf16.msra.mxu0 %v262
    %279 = vmatprep.subr.bf16.mxu0 0
    %280 = vmatpush1.bf16.msra.mxu0 %v261
    %281 = vmatprep.subr.bf16.mxu0 0
    %282 = vmatpush1.bf16.msra.mxu0 %v260
    %283 = vmatprep.subr.bf16.mxu0 0
    %284 = vmatpush1.bf16.msra.mxu0 %v259
    %285 = vmatprep.subr.bf16.mxu0 0
    %286 = vmatpush1.bf16.msra.mxu0 %v258
    %287 = vmatprep.subr.bf16.mxu0 0
    %288 = vmatpush1.bf16.msra.mxu0 %v257
    %289 = vmatprep.subr.bf16.mxu0 0
    %290 = vmatpush2.bf16.msra.mxu0 0
    %291 = vmatprep.subr.bf16.mxu0 0
    %292 = vmatpush2.bf16.msra.mxu0 0
    %293 = vmatprep.subr.bf16.mxu0 0
    %294 = vmatpush2.bf16.msra.mxu0 0
    %295 = vmatprep.subr.bf16.mxu0 0
    %296 = vmatpush2.bf16.msra.mxu0 0
    %297 = vmatprep.subr.bf16.mxu0 0
    %298 = vmatpush2.bf16.msra.mxu0 0
    %299 = vmatprep.subr.bf16.mxu0 0
    %300 = vmatpush2.bf16.msra.mxu0 0
    %301 = vmatprep.subr.bf16.mxu0 0
    %302 = vmatpush2.bf16.msra.mxu0 0
    %303 = vmatprep.subr.bf16.mxu0 0
    %304 = vmatpush2.bf16.msra.mxu0 0
    %305 = vmatprep.mubr.bf16.mxu0 0
    %306 = vmatmul.mubr.bf16.gmra.mxu0 %v201
    %v307 = vpop.f32.mrf.mxu0
    %v308 = vadd.f32 %v223, %v307
    %v309 = vpop.f32.mrf.mxu0
    %v310 = vpop.f32.mrf.mxu0
    %v311 = vpop.f32.mrf.mxu0
    %312 = vdwg.mxu0
    %v313 = vmax.f32 %v308, 0.0
    %v314 = vld [vmem:[%s7] sm:$0x1]
    %v315 = vpack.c.bf16 %v313, %v313
    %v316 = vld [vmem:[#allocation2] sm:$0x1]
    %318 = vset.pattern.permute.xlu0 0
    %319 = vperm.xlu0 %318, %v316
    %v320 = vpop.permute.xlu0 %319
    %v322 = vlaneseq
    %v323 = vshrl.u32 %v322, 7
    %v324 = vsub.s32 0, %v323
    %v325 = vrot.slane %v320, %v324
    %326 = vmatprep.subr.bf16.mxu0 0
    %327 = vmatpush1.bf16.xpose.msra.mxu0 0
    %328 = vmatprep.subr.bf16.mxu0 0
    %329 = vmatpush1.bf16.xpose.msra.mxu0 0
    %330 = vmatprep.subr.bf16.mxu0 0
    %331 = vmatpush1.bf16.xpose.msra.mxu0 0
    %332 = vmatprep.subr.bf16.mxu0 0
    %333 = vmatpush1.bf16.xpose.msra.mxu0 0
    %334 = vmatprep.subr.bf16.mxu0 0
    %335 = vmatpush1.bf16.xpose.msra.mxu0 0
    %336 = vmatprep.subr.bf16.mxu0 0
    %337 = vmatpush1.bf16.xpose.msra.mxu0 0
    %338 = vmatprep.subr.bf16.mxu0 0
    %339 = vmatpush1.bf16.xpose.msra.mxu0 0
    %340 = vmatprep.subr.bf16.mxu0 0
    %341 = vmatpush1.bf16.xpose.msra.mxu0 %v315
    %342 = vmatprep.subr.bf16.mxu0 0
    %343 = vmatpush2.bf16.xpose.msra.mxu0 0
    %344 = vmatprep.subr.bf16.mxu0 0
    %345 = vmatpush2.bf16.xpose.msra.mxu0 0
    %346 = vmatprep.subr.bf16.mxu0 0
    %347 = vmatpush2.bf16.xpose.msra.mxu0 0
    %348 = vmatprep.subr.bf16.mxu0 0
    %349 = vmatpush2.bf16.xpose.msra.mxu0 0
    %350 = vmatprep.subr.bf16.mxu0 0
    %351 = vmatpush2.bf16.xpose.msra.mxu0 0
    %352 = vmatprep.subr.bf16.mxu0 0
    %353 = vmatpush2.bf16.xpose.msra.mxu0 0
    %354 = vmatprep.subr.bf16.mxu0 0
    %355 = vmatpush2.bf16.xpose.msra.mxu0 0
    %356 = vmatprep.subr.bf16.mxu0 0
    %357 = vmatpush2.bf16.xpose.msra.mxu0 0
    %358 = vmatprep.mubr.bf16.mxu0 0
    %359 = vmatmul.mubr.bf16.gmra.mxu0 %v314
    %v360 = vpop.f32.mrf.mxu0
    %v361 = vadd.f32 %v325, %v360
    %v362 = vpop.f32.mrf.mxu0
    %v363 = vpop.f32.mrf.mxu0
    %v364 = vpop.f32.mrf.mxu0
    %365 = vdwg.mxu0
    %vm366 = vcmask 57344
    %367 = vst.msk [vmem:[#allocation11] sm:$0x1] %vm366, %v361
    // Predicated region
    $region54: #{tpu_custom_call.1} parent=1 // pred_check
      _
    $region55: #{tpu_custom_call.1} parent=1 // pred_check_branch
      %369 = sbr.rel (0) target = $region57
    $region56: #{tpu_custom_call.1} parent=1 // pred_region
      %s371 = ssub.s32 16, 16
      %372 = vsyncadd [#allocation5], %s371
      %s374 = sshll.u32 [#allocation11], 4
      %s375 = int_to_ptr.vmem [resolvable:$true] %s374
      %377 = dma.vmem_to_hbm [thread:$0]  %s375, 16, %s9, [#allocation5]
    $region57: #{tpu_custom_call.1} parent=1 // pred_fallthru
      _
    // Predicated region
    $region58: #{tpu_custom_call.1} parent=1 // pred_check
      _
    $region59: #{tpu_custom_call.1} parent=1 // pred_check_branch
      %379 = sbr.rel (0) target = $region61
    $region60: #{tpu_custom_call.1} parent=1 // pred_region
      %380 = dma.done [#allocation5], 16
    $region61: #{tpu_custom_call.1} parent=1 // pred_fallthru
      _
    %381 = vsyncpa [#allocation4], 1
    %382 = vsyncpa [#allocation7], 1
    %383 = vsyncpa [#allocation10], 1
    %384 = vsyncpa [#allocation5], 1

</llo_original>
